<compile_context>
chip_gen: v7x
topology: tpu7x:2x2x1
jax: 0.10.0
libtpu: 0.0.40
codegen_flags: <defaults>
</compile_context>

<pallas_src>
import jax
import jax.numpy as jnp
from jax import lax
from jax.experimental import pallas as pl
from jax.experimental.pallas import tpu as pltpu


def _round_up(x, m):
    return (x + m - 1) // m * m


def _sublane_multiple(dtype):
    # Min second-to-last tile dim: 8 for 4-byte, 16 for 2-byte, 32 for 1-byte.
    return 8 * (4 // jnp.dtype(dtype).itemsize)


def _linear_kernel(x_ref, w_ref, b_ref, o_ref, acc_ref):
    """x_ref: (tm, tk); w_ref: (tn, tk) [native torch layout]; b_ref: (1, tn);
    o_ref: (tm, tn); acc_ref: resident f32 (tm, tn) accumulator.

    Invariant (do not reorder the grid): K is the innermost grid axis, marked
    "arbitrary", and the output index_map ignores k — that is what makes the
    resident accumulator legal.
    """
    k = pl.program_id(2)

    # Contract the shared K axis against the (N, K)-layout weight tile directly;
    # no transposed copy of W is ever materialized in HBM.
    partial = lax.dot_general(
        x_ref[...], w_ref[...],
        dimension_numbers=(((1,), (1,)), ((), ())),
        preferred_element_type=jnp.float32)

    @pl.when(k == 0)
    def _():
        # Fold the bias into the accumulator init and write the first partial
        # product directly (saves a zeros store + add pass per output tile).
        acc_ref[...] = partial + b_ref[...].astype(jnp.float32)

    @pl.when(k > 0)
    def _():
        acc_ref[...] += partial

    @pl.when(k == pl.num_programs(2) - 1)
    def _():
        o_ref[...] = acc_ref[...].astype(o_ref.dtype)


def linear_layer(x, w, b, *, tm=512, tn=512, tk=512, operand_dtype=None):
    """y = x @ w.T + b with w kept in native PyTorch (out_dim, in_dim) layout.

    x: (M, K); w: (N, K); b: (N,).
    operand_dtype=jnp.bfloat16 streams bf16 operands to the MXU (f32 accumulation
    and the original output dtype are preserved).
    """
    M, K = x.shape
    N, K2 = w.shape
    assert K == K2 and b.shape == (N,)

    out_dtype = x.dtype
    if operand_dtype is not None:
        x = x.astype(operand_dtype)
        w = w.astype(operand_dtype)

    sub = _sublane_multiple(x.dtype)

    # Lane/sublane-aligned effective tiles, clamped to the padded array extents
    # so tiny shapes don't over-allocate VMEM.
    tm_e = min(tm, _round_up(M, sub))
    tn_e = min(tn, _round_up(N, 128))
    tk_e = min(tk, _round_up(K, 128))

    Mp = _round_up(M, tm_e)
    Np = _round_up(N, tn_e)
    Kp = _round_up(K, tk_e)

    # Pad only when actually needed (elided entirely on aligned production shapes).
    xp = x if (Mp, Kp) == (M, K) else jnp.pad(x, ((0, Mp - M), (0, Kp - K)))
    wp = w if (Np, Kp) == (N, K) else jnp.pad(w, ((0, Np - N), (0, Kp - K)))
    bp = (b if Np == N else jnp.pad(b, (0, Np - N))).reshape(1, Np)

    grid = (Mp // tm_e, Np // tn_e, Kp // tk_e)

    in_itemsize = jnp.dtype(x.dtype).itemsize
    out_itemsize = jnp.dtype(out_dtype).itemsize
    # Double-buffered x / W / bias + double-buffered output + f32 accumulator.
    vmem_needed = (2 * (tm_e * tk_e + tn_e * tk_e + tn_e) * in_itemsize
                   + 2 * tm_e * tn_e * out_itemsize
                   + tm_e * tn_e * 4)
    # Raise the scoped limit above the 16/32 MiB defaults with headroom; stays
    # within v7x's 64 MiB physical VMEM for the default tile configuration.
    vmem_limit = min(max(int(vmem_needed * 1.25), 32 * 1024 * 1024),
                     100 * 1024 * 1024)

    cost = pl.CostEstimate(
        flops=2 * Mp * Np * Kp,
        transcendentals=0,
        bytes_accessed=(xp.size * in_itemsize + wp.size * in_itemsize
                        + bp.size * in_itemsize + Mp * Np * out_itemsize))

    out = pl.pallas_call(
        _linear_kernel,
        out_shape=jax.ShapeDtypeStruct((Mp, Np), out_dtype),
        grid_spec=pltpu.PrefetchScalarGridSpec(
            num_scalar_prefetch=0,
            grid=grid,
            in_specs=[
                pl.BlockSpec((tm_e, tk_e), lambda i, j, k: (i, k)),   # x
                pl.BlockSpec((tn_e, tk_e), lambda i, j, k: (j, k)),   # W (N, K)
                pl.BlockSpec((1, tn_e), lambda i, j, k: (0, j)),      # bias
            ],
            out_specs=pl.BlockSpec((tm_e, tn_e), lambda i, j, k: (i, j)),
            scratch_shapes=[pltpu.VMEM((tm_e, tn_e), jnp.float32)],
        ),
        compiler_params=pltpu.CompilerParams(
            dimension_semantics=("parallel", "parallel", "arbitrary"),
            vmem_limit_bytes=vmem_limit),
        cost_estimate=cost,
    )(xp, wp, bp)

    if (Mp, Np) != (M, N):
        out = out[:M, :N]
    return out


if __name__ == "__main__":
    key = jax.random.PRNGKey(0)
    kx, kw, kb = jax.random.split(key, 3)

    # Small, deliberately non-aligned shapes so padding, a 2 x 1 x 2 grid, and
    # the K-reduction accumulator path are all exercised.
    M, in_dim, out_dim = 200, 300, 100
    x = jax.random.normal(kx, (M, in_dim), jnp.float32)

    # xavier_normal_-style weight scale; the module zeroes the bias at init, but
    # a small nonzero bias is used here to exercise the fused bias path.
    std = (2.0 / (in_dim + out_dim)) ** 0.5
    w = std * jax.random.normal(kw, (out_dim, in_dim), jnp.float32)  # (N, K)
    b = 0.1 * jax.random.normal(kb, (out_dim,), jnp.float32)

    y = linear_layer(x, w, b, tm=128, tn=128, tk=256)
    y = jax.block_until_ready(y)

    # Pure-JAX reference.
    ref = x @ w.T + b
    assert y.shape == (M, out_dim)
    assert jnp.allclose(y, ref, atol=2e-3, rtol=2e-3)
    print("KERNEL_OK")
</pallas_src>

<mosaic_0001>
module attributes {stable_mosaic.version = 11 : i64} {
  func.func @_linear_kernel(%arg0: i32, %arg1: i32, %arg2: i32, %arg3: memref<128x256xf32, #tpu.memory_space<vmem>>, %arg4: memref<128x256xf32, #tpu.memory_space<vmem>>, %arg5: memref<1x128xf32, #tpu.memory_space<vmem>>, %arg6: memref<128x128xf32, #tpu.memory_space<vmem>>, %arg7: memref<128x128xf32, #tpu.memory_space<vmem>>) attributes {dimension_semantics = [#tpu.dimension_semantics<parallel>, #tpu.dimension_semantics<parallel>, #tpu.dimension_semantics<arbitrary>], iteration_bounds = array<i64: 2, 1, 2>, scalar_prefetch = 0 : i64, scratch_operands = 1 : i64, tpu.core_type = #tpu.core_type<tc>, window_params = [{transform_indices = @transform_0, window_bounds = array<i64: 128, 256>}, {transform_indices = @transform_1, window_bounds = array<i64: 128, 256>}, {transform_indices = @transform_2, window_bounds = array<i64: 1, 128>}, {transform_indices = @transform_3, window_bounds = array<i64: 128, 128>}]} {
    %c0 = arith.constant 0 : index
    %c0_0 = arith.constant 0 : index
    %0 = vector.load %arg3[%c0, %c0_0] : memref<128x256xf32, #tpu.memory_space<vmem>>, vector<128x256xf32>
    %c0_1 = arith.constant 0 : index
    %c0_2 = arith.constant 0 : index
    %1 = vector.load %arg4[%c0_1, %c0_2] : memref<128x256xf32, #tpu.memory_space<vmem>>, vector<128x256xf32>
    %cst = arith.constant dense<0.000000e+00> : vector<128x128xf32>
    %2 = tpu.matmul %0, %1, %cst {dimension_numbers = #tpu.dot_dimension_numbers<[1], [1], [0], [0], [0, 0, 1, 0], [], []>} : vector<128x256xf32>, vector<128x256xf32>, vector<128x128xf32> -> vector<128x128xf32>
    %c0_i32 = arith.constant 0 : i32
    %3 = arith.cmpi eq, %arg2, %c0_i32 : i32
    %4 = arith.extui %3 : i1 to i32
    %c0_i32_3 = arith.constant 0 : i32
    %5 = arith.cmpi ne, %4, %c0_i32_3 : i32
    scf.if %5 {
      %c0_7 = arith.constant 0 : index
      %c0_8 = arith.constant 0 : index
      %12 = vector.load %arg5[%c0_7, %c0_8] : memref<1x128xf32, #tpu.memory_space<vmem>>, vector<1x128xf32>
      %13 = vector.broadcast %12 : vector<1x128xf32> to vector<128x128xf32>
      %14 = arith.addf %2, %13 : vector<128x128xf32>
      %c0_9 = arith.constant 0 : index
      %c0_10 = arith.constant 0 : index
      %15 = vector.load %arg7[%c0_9, %c0_10] : memref<128x128xf32, #tpu.memory_space<vmem>>, vector<128x128xf32>
      tpu.vector_store %arg7[%c0_9, %c0_10], %14 {strides = array<i32>} : memref<128x128xf32, #tpu.memory_space<vmem>>, vector<128x128xf32>,
    } else {
    }
    %c0_i32_4 = arith.constant 0 : i32
    %6 = arith.cmpi sgt, %arg2, %c0_i32_4 : i32
    %7 = arith.extui %6 : i1 to i32
    %c0_i32_5 = arith.constant 0 : i32
    %8 = arith.cmpi ne, %7, %c0_i32_5 : i32
    scf.if %8 {
      %c0_7 = arith.constant 0 : index
      %c0_8 = arith.constant 0 : index
      %12 = vector.load %arg7[%c0_7, %c0_8] : memref<128x128xf32, #tpu.memory_space<vmem>>, vector<128x128xf32>
      %13 = arith.addf %12, %2 : vector<128x128xf32>
      %c0_9 = arith.constant 0 : index
      %c0_10 = arith.constant 0 : index
      %14 = vector.load %arg7[%c0_9, %c0_10] : memref<128x128xf32, #tpu.memory_space<vmem>>, vector<128x128xf32>
      tpu.vector_store %arg7[%c0_9, %c0_10], %13 {strides = array<i32>} : memref<128x128xf32, #tpu.memory_space<vmem>>, vector<128x128xf32>,
    } else {
    }
    %c1_i32 = arith.constant 1 : i32
    %9 = arith.cmpi eq, %arg2, %c1_i32 : i32
    %10 = arith.extui %9 : i1 to i32
    %c0_i32_6 = arith.constant 0 : i32
    %11 = arith.cmpi ne, %10, %c0_i32_6 : i32
    scf.if %11 {
      %c0_7 = arith.constant 0 : index
      %c0_8 = arith.constant 0 : index
      %12 = vector.load %arg7[%c0_7, %c0_8] : memref<128x128xf32, #tpu.memory_space<vmem>>, vector<128x128xf32>
      %c0_9 = arith.constant 0 : index
      %c0_10 = arith.constant 0 : index
      %13 = vector.load %arg6[%c0_9, %c0_10] : memref<128x128xf32, #tpu.memory_space<vmem>>, vector<128x128xf32>
      tpu.vector_store %arg6[%c0_9, %c0_10], %12 {strides = array<i32>} : memref<128x128xf32, #tpu.memory_space<vmem>>, vector<128x128xf32>,
    } else {
    }
    return
  }
  func.func @transform_0(%arg0: i32, %arg1: i32, %arg2: i32) -> (i32, i32) {
    %c0_i32 = arith.constant 0 : i32
    return %arg0, %arg2 : i32, i32
  }
  func.func @transform_1(%arg0: i32, %arg1: i32, %arg2: i32) -> (i32, i32) {
    %c0_i32 = arith.constant 0 : i32
    return %arg1, %arg2 : i32, i32
  }
  func.func @transform_2(%arg0: i32, %arg1: i32, %arg2: i32) -> (i32, i32) {
    %c0_i32 = arith.constant 0 : i32
    %c0_i32_0 = arith.constant 0 : i32
    return %c0_i32, %arg1 : i32, i32
  }
  func.func @transform_3(%arg0: i32, %arg1: i32, %arg2: i32) -> (i32, i32) {
    %c0_i32 = arith.constant 0 : i32
    return %arg0, %arg1 : i32, i32
  }
}

</mosaic_0001>

<llo_original>
// kernel: tpu_custom_call.1
$region0: #{tpu_custom_call.1}
  #allocation0 [shape = 'u32[]', space=smem, size = 0x4, offset = 0x4, fixed_abs, tag = 'smem constant byte address 0x4 - core index']
  #allocation1 [shape = 'u32[144,128]{1,0:T(1,128)}', space=vmem, size = 0x12000, scoped, tag = 'internal scratch']
  #allocation2 [shape = 'f32[128,128]{1,0:T(8,128)}', space=vmem, size = 0x10000, scoped, tag = 'scratch operand']
  %s0 = inlined_call_operand.hbm [shape: f32[256,512], index: 0, kind: input, shape index: {}]
  %s1 = inlined_call_operand.hbm [shape: f32[128,512], index: 1, kind: input, shape index: {}]
  %s2 = inlined_call_operand.vmem [shape: f32[1,128], index: 2, kind: input, shape index: {}]
  %s3 = inlined_call_operand.hbm [shape: f32[256,128], index: 3, kind: output, shape index: {}]
  %s4 = sld [smem:[#allocation0]]
  $region65: #{tpu_custom_call.1} parent=0
    _
  %s6 = ssub.s32 1, %s4
  %s7 = scalar_select 0, %s6, %s4
  $region1: #{tpu_custom_call.1} parent=0
    #allocation3 [shape = 'u8[262144]{0}', space=vmem, size = 0x40000, scoped, tag = 'input window, operand 0']
    #allocation4 [shape = 's32[2]{0}', space=sflag, size = 0x8, scoped, tag = 'scoped memory for tpu_custom_call.1']
    #allocation5 [shape = 's32[2]{0}', space=sflag, size = 0x8, scoped, tag = 'scoped memory for tpu_custom_call.1']
    #allocation6 [shape = 'u8[262144]{0}', space=vmem, size = 0x40000, scoped, tag = 'input window, operand 1']
    #allocation7 [shape = 's32[2]{0}', space=sflag, size = 0x8, scoped, tag = 'scoped memory for tpu_custom_call.1']
    #allocation8 [shape = 'u8[131072]{0}', space=vmem, size = 0x20000, scoped, tag = 'output window, operand 0']
    %8 = vsyncpa [#allocation4], 0
    %s9 = scalar_lea.sflag [#allocation4], 1
    %10 = vsyncpa %s9, 0
    %11 = vsyncpa [#allocation7], 0
    %s12 = scalar_lea.sflag [#allocation7], 1
    %13 = vsyncpa %s12, 0
    %14 = vsyncpa [#allocation5], 0
    %s15 = scalar_lea.sflag [#allocation5], 1
    %16 = vsyncpa %s15, 0
    loop: start=0, step=1, limit=6
    $region2: #{tpu_custom_call.1} parent=1 // loop_pre_header
      _
    $region3: #{tpu_custom_call.1} parent=1 // loop_header
      %s18 = sphi 0, %s22
      %p19 = scmp.ge.s32.totalorder %s18, 6
      %s25 = sphi 0, %s44
      %s26 = sphi 0, %s40
      %s27 = sphi 0, %s36
      %s28 = sphi 0, %s25
      %s29 = sphi 0, %s26
      %s30 = sphi 0, %s27
      %s31 = sphi 0, %s28
      %s32 = sphi 0, %s29
      %s33 = sphi 0, %s30
      %s49 = sphi 0, %s51
      %s52 = sphi 0, %s49
      %s53 = sphi 0, %s52
      %s69 = sphi 0, %s53
      %s77 = sphi 0, %s79
      %s80 = sphi 0, %s77
      %s81 = sphi 0, %s80
      %s97 = sphi 0, %s81
      %s103 = sphi 0, %s105
      %s106 = sphi 0, %s103
      %s107 = sphi 0, %s106
      %s123 = sphi 0, %s107
      %s131 = sphi 0, %s133
      %s134 = sphi 0, %s131
      %s135 = sphi 0, %s134
      %s151 = sphi 0, %s135
    $region4: #{tpu_custom_call.1} parent=1 // loop_header_branch
      %21 = sbr.rel (%p19) target = $region8
    $region5: #{tpu_custom_call.1} parent=1 // loop_body
      %s23 = ssub.s32 %s18, 1
      %s24 = ssub.s32 %s18, 2
      %s34 = sadd.s32 1, %s27
      %p35 = scmp.ge.s32.totalorder %s34, 2
      %s36 = scalar_select %p35, 0, %s34
      %s37 = sadd.s32 1, %s26
      %s38 = scalar_select %p35, %s37, %s26
      %p39 = scmp.ge.s32.totalorder %s38, 1
      %s40 = scalar_select %p39, 0, %s38
      %s41 = sadd.s32 1, %s25
      %s42 = scalar_select %p39, %s41, %s25
      %p43 = scmp.ge.s32.totalorder %s42, 2
      %s44 = scalar_select %p43, 0, %s42
      %s45 = ssub.s32 %s25, %s44
      %s46 = ssub.s32 %s27, %s36
      %s47 = sor.u32 %s45, %s46
      %p48 = scmp.eq.s32.totalorder %s47, 0
      %s50 = sadd.s32 %s49, 1
      %s51 = scalar_select %p48, %s49, %s50
      %p54 = pneg %p48
      %p55 = scmp.eq.s32.totalorder %s18, 3
      %p56 = por %p54, %p55
      %p57 = scmp.ne.s32.totalorder %s49, %s52
      %p58 = scmp.eq.s32.totalorder %s18, 0
      %p59 = por %p57, %p58
      %p60 = scmp.ne.s32.totalorder %s49, %s52
      %p61 = scmp.eq.s32.totalorder %s23, 3
      %p62 = por %p60, %p61
      %p63 = scmp.ne.s32.totalorder %s52, %s53
      %p64 = scmp.eq.s32.totalorder %s23, 0
      %p65 = por %p63, %p64
      %p66 = scmp.ne.s32.totalorder %s52, %s53
      %p67 = scmp.eq.s32.totalorder %s24, 3
      %p68 = por %p66, %p67
      %p70 = scmp.ne.s32.totalorder %s53, %s69
      %p71 = scmp.eq.s32.totalorder %s24, 0
      %p72 = por %p70, %p71
      %s73 = ssub.s32 %s26, %s40
      %s74 = ssub.s32 %s27, %s36
      %s75 = sor.u32 %s73, %s74
      %p76 = scmp.eq.s32.totalorder %s75, 0
      %s78 = sadd.s32 %s77, 1
      %s79 = scalar_select %p76, %s77, %s78
      %p82 = pneg %p76
      %p83 = scmp.eq.s32.totalorder %s18, 3
      %p84 = por %p82, %p83
      %p85 = scmp.ne.s32.totalorder %s77, %s80
      %p86 = scmp.eq.s32.totalorder %s18, 0
      %p87 = por %p85, %p86
      %p88 = scmp.ne.s32.totalorder %s77, %s80
      %p89 = scmp.eq.s32.totalorder %s23, 3
      %p90 = por %p88, %p89
      %p91 = scmp.ne.s32.totalorder %s80, %s81
      %p92 = scmp.eq.s32.totalorder %s23, 0
      %p93 = por %p91, %p92
      %p94 = scmp.ne.s32.totalorder %s80, %s81
      %p95 = scmp.eq.s32.totalorder %s24, 3
      %p96 = por %p94, %p95
      %p98 = scmp.ne.s32.totalorder %s81, %s97
      %p99 = scmp.eq.s32.totalorder %s24, 0
      %p100 = por %p98, %p99
      %s101 = ssub.s32 %s26, %s40
      %p102 = scmp.eq.s32.totalorder %s101, 0
      %s104 = sadd.s32 %s103, 1
      %s105 = scalar_select %p102, %s103, %s104
      %p108 = pneg %p102
      %p109 = scmp.eq.s32.totalorder %s18, 3
      %p110 = por %p108, %p109
      %p111 = scmp.ne.s32.totalorder %s103, %s106
      %p112 = scmp.eq.s32.totalorder %s18, 0
      %p113 = por %p111, %p112
      %p114 = scmp.ne.s32.totalorder %s103, %s106
      %p115 = scmp.eq.s32.totalorder %s23, 3
      %p116 = por %p114, %p115
      %p117 = scmp.ne.s32.totalorder %s106, %s107
      %p118 = scmp.eq.s32.totalorder %s23, 0
      %p119 = por %p117, %p118
      %p120 = scmp.ne.s32.totalorder %s106, %s107
      %p121 = scmp.eq.s32.totalorder %s24, 3
      %p122 = por %p120, %p121
      %p124 = scmp.ne.s32.totalorder %s107, %s123
      %p125 = scmp.eq.s32.totalorder %s24, 0
      %p126 = por %p124, %p125
      %s127 = ssub.s32 %s25, %s44
      %s128 = ssub.s32 %s26, %s40
      %s129 = sor.u32 %s127, %s128
      %p130 = scmp.eq.s32.totalorder %s129, 0
      %s132 = sadd.s32 %s131, 1
      %s133 = scalar_select %p130, %s131, %s132
      %p136 = pneg %p130
      %p137 = scmp.eq.s32.totalorder %s18, 3
      %p138 = por %p136, %p137
      %p139 = scmp.ne.s32.totalorder %s131, %s134
      %p140 = scmp.eq.s32.totalorder %s18, 0
      %p141 = por %p139, %p140
      %p142 = scmp.ne.s32.totalorder %s131, %s134
      %p143 = scmp.eq.s32.totalorder %s23, 3
      %p144 = por %p142, %p143
      %p145 = scmp.ne.s32.totalorder %s134, %s135
      %p146 = scmp.eq.s32.totalorder %s23, 0
      %p147 = por %p145, %p146
      %p148 = scmp.ne.s32.totalorder %s134, %s135
      %p149 = scmp.eq.s32.totalorder %s24, 3
      %p150 = por %p148, %p149
      %p152 = scmp.ne.s32.totalorder %s135, %s151
      %p153 = scmp.eq.s32.totalorder %s24, 0
      %p154 = por %p152, %p153
      %p155 = scmp.le.s32.totalorder 1, %s18
      %p156 = scmp.lt.s32.totalorder %s18, 5
      %p157 = pnand %p155, %p156
      %p158 = pneg %p157
      // Predicated region
      $region9: #{tpu_custom_call.1} parent=5 // pred_check
        _
      $region10: #{tpu_custom_call.1} parent=5 // pred_check_branch
        %160 = sbr.rel (%p157) target = $region12
      $region11: #{tpu_custom_call.1} parent=5 // pred_region
        %s161 = ssub.s32 %s18, 1
        // Predicated region
        $region13: #{tpu_custom_call.1} parent=11 // pred_check
          %p162 = pneg %p119
        $region14: #{tpu_custom_call.1} parent=11 // pred_check_branch
          %164 = sbr.rel (%p162) target = $region16
        $region15: #{tpu_custom_call.1} parent=11 // pred_region
          %p165 = scmp.lt.s32.totalorder %s29, 0
          %s166 = scalar_select %p165, %s29, 0
          %s167 = scalar_lea.vmem %s2, %s166
        $region16: #{tpu_custom_call.1} parent=11 // pred_fallthru
          _
      $region12: #{tpu_custom_call.1} parent=5 // pred_fallthru
        _
      %p168 = scmp.lt.s32.totalorder %s18, 4
      // Predicated region
      $region17: #{tpu_custom_call.1} parent=5 // pred_check
        %p169 = pneg %p168
      $region18: #{tpu_custom_call.1} parent=5 // pred_check_branch
        %171 = sbr.rel (%p169) target = $region20
      $region19: #{tpu_custom_call.1} parent=5 // pred_region
        // Predicated region
        $region21: #{tpu_custom_call.1} parent=19 // pred_check
          %p172 = pneg %p59
        $region22: #{tpu_custom_call.1} parent=19 // pred_check_branch
          %174 = sbr.rel (%p172) target = $region24
        $region23: #{tpu_custom_call.1} parent=19 // pred_region
          %s175 = sand.u32 %s49, 1
          %s176 = scalar_lea.sflag [#allocation4], %s175
          %s177 = sand.u32 %s49, 1
          %s178 = smul.addr %s177, 256
          %s179 = scalar_lea.vmem [#allocation3], %s178
          %s180 = smul.u32 16, %s25
          %s181 = smul.u32 2, %s27
          %s183 = ssub.s32 4096, 4096
          %184 = vsyncadd %s176, %s183
          %s185 = smul.addr %s180, 4
          %s186 = sadd.s32 %s181, %s185
          %s187 = smul.addr %s186, 128
          %s188 = scalar_lea.hbm %s0, %s187
          %s189 = sshll.u32 %s179, 4
          %s190 = int_to_ptr.vmem [resolvable:$true] %s189
          %195 = dma.hbm_to_vmem [thread:$0]  %s188, 4096, %s190, %s176, 512, 256, 16
        $region24: #{tpu_custom_call.1} parent=19 // pred_fallthru
          _
        // Predicated region
        $region25: #{tpu_custom_call.1} parent=19 // pred_check
          %p196 = pneg %p87
        $region26: #{tpu_custom_call.1} parent=19 // pred_check_branch
          %198 = sbr.rel (%p196) target = $region28
        $region27: #{tpu_custom_call.1} parent=19 // pred_region
          %s199 = sand.u32 %s77, 1
          %s200 = scalar_lea.sflag [#allocation7], %s199
          %s201 = sand.u32 %s77, 1
          %s202 = smul.addr %s201, 256
          %s203 = scalar_lea.vmem [#allocation6], %s202
          %s204 = smul.u32 16, %s26
          %s205 = smul.u32 2, %s27
          %s207 = ssub.s32 4096, 4096
          %208 = vsyncadd %s200, %s207
          %s209 = smul.addr %s204, 4
          %s210 = sadd.s32 %s205, %s209
          %s211 = smul.addr %s210, 128
          %s212 = scalar_lea.hbm %s1, %s211
          %s213 = sshll.u32 %s203, 4
          %s214 = int_to_ptr.vmem [resolvable:$true] %s213
          %219 = dma.hbm_to_vmem [thread:$0]  %s212, 4096, %s214, %s200, 512, 256, 16
        $region28: #{tpu_custom_call.1} parent=19 // pred_fallthru
          _
      $region20: #{tpu_custom_call.1} parent=5 // pred_fallthru
        _
      %p220 = scmp.le.s32.totalorder 1, %s18
      %p221 = scmp.lt.s32.totalorder %s18, 5
      %p222 = pnand %p220, %p221
      %p223 = pneg %p222
      // Predicated region
      $region29: #{tpu_custom_call.1} parent=5 // pred_check
        _
      $region30: #{tpu_custom_call.1} parent=5 // pred_check_branch
        %225 = sbr.rel (%p222) target = $region32
      $region31: #{tpu_custom_call.1} parent=5 // pred_region
        %s226 = ssub.s32 %s18, 1
        %s227 = sand.u32 %s52, 1
        %s228 = scalar_lea.sflag [#allocation4], %s227
        %s229 = sand.u32 %s52, 1
        %s230 = smul.addr %s229, 256
        %s231 = scalar_lea.vmem [#allocation3], %s230
        // Predicated region
        $region33: #{tpu_custom_call.1} parent=31 // pred_check
          %p232 = pneg %p65
        $region34: #{tpu_custom_call.1} parent=31 // pred_check_branch
          %234 = sbr.rel (%p232) target = $region36
        $region35: #{tpu_custom_call.1} parent=31 // pred_region
          %235 = dma.done %s228, 4096
        $region36: #{tpu_custom_call.1} parent=31 // pred_fallthru
          _
        %s236 = sand.u32 %s80, 1
        %s237 = scalar_lea.sflag [#allocation7], %s236
        %s238 = sand.u32 %s80, 1
        %s239 = smul.addr %s238, 256
        %s240 = scalar_lea.vmem [#allocation6], %s239
        // Predicated region
        $region37: #{tpu_custom_call.1} parent=31 // pred_check
          %p241 = pneg %p93
        $region38: #{tpu_custom_call.1} parent=31 // pred_check_branch
          %243 = sbr.rel (%p241) target = $region40
        $region39: #{tpu_custom_call.1} parent=31 // pred_region
          %244 = dma.done %s237, 4096
        $region40: #{tpu_custom_call.1} parent=31 // pred_fallthru
          _
        %s245 = sand.u32 %s52, 1
        %s246 = scalar_lea.sflag [#allocation4], %s245
        %s247 = sand.u32 %s52, 1
        %s248 = smul.addr %s247, 256
        %s249 = scalar_lea.vmem [#allocation3], %s248
        %p250 = pneg %p65
        %p251 = pneg %p62
        %s252 = sand.u32 %s80, 1
        %s253 = scalar_lea.sflag [#allocation7], %s252
        %s254 = sand.u32 %s80, 1
        %s255 = smul.addr %s254, 256
        %s256 = scalar_lea.vmem [#allocation6], %s255
        %p257 = pneg %p93
        %p258 = pneg %p90
        %p259 = scmp.lt.s32.totalorder %s29, 0
        %s260 = scalar_select %p259, %s29, 0
        %s261 = scalar_lea.vmem %s2, %s260
        %p262 = pneg %p119
        %p263 = pneg %p116
        %p264 = pneg %p147
        %p265 = pneg %p144
        %s266 = sand.u32 %s134, 1
        %s267 = scalar_lea.sflag [#allocation5], %s266
        %s268 = sand.u32 %s134, 1
        %s269 = smul.addr %s268, 128
        %s270 = scalar_lea.vmem [#allocation8], %s269
        %s271 = smul.u32 16, %s28
        %s272 = smul.u32 2, %s30
        %s273 = smul.u32 16, %s29
        %s274 = smul.u32 2, %s30
        %p275 = scmp.lt.s32.totalorder %s29, 0
        %s276 = scalar_select %p275, %s29, 0
        %s277 = scalar_lea.vmem %s2, %s276
        %s278 = smul.u32 16, %s28
        %v279 = vld [vmem:[%s231] sm:$0xff]
        %v280 = vld [vmem:[%s231 + $0x8] sm:$0xff]
        %v281 = vld [vmem:[%s231 + $0x10] sm:$0xff]
        %v282 = vld [vmem:[%s231 + $0x18] sm:$0xff]
        %v283 = vld [vmem:[%s231 + $0x20] sm:$0xff]
        %v284 = vld [vmem:[%s231 + $0x28] sm:$0xff]
        %v285 = vld [vmem:[%s231 + $0x30] sm:$0xff]
        %v286 = vld [vmem:[%s231 + $0x38] sm:$0xff]
        %v287 = vld [vmem:[%s231 + $0x40] sm:$0xff]
        %v288 = vld [vmem:[%s231 + $0x48] sm:$0xff]
        %v289 = vld [vmem:[%s231 + $0x50] sm:$0xff]
        %v290 = vld [vmem:[%s231 + $0x58] sm:$0xff]
        %v291 = vld [vmem:[%s231 + $0x60] sm:$0xff]
        %v292 = vld [vmem:[%s231 + $0x68] sm:$0xff]
        %v293 = vld [vmem:[%s231 + $0x70] sm:$0xff]
        %v294 = vld [vmem:[%s231 + $0x78] sm:$0xff]
        %v295 = vld [vmem:[%s231 + $0x80] sm:$0xff]
        %v296 = vld [vmem:[%s231 + $0x88] sm:$0xff]
        %v297 = vld [vmem:[%s231 + $0x90] sm:$0xff]
        %v298 = vld [vmem:[%s231 + $0x98] sm:$0xff]
        %v299 = vld [vmem:[%s231 + $0xa0] sm:$0xff]
        %v300 = vld [vmem:[%s231 + $0xa8] sm:$0xff]
        %v301 = vld [vmem:[%s231 + $0xb0] sm:$0xff]
        %v302 = vld [vmem:[%s231 + $0xb8] sm:$0xff]
        %v303 = vld [vmem:[%s231 + $0xc0] sm:$0xff]
        %v304 = vld [vmem:[%s231 + $0xc8] sm:$0xff]
        %v305 = vld [vmem:[%s231 + $0xd0] sm:$0xff]
        %v306 = vld [vmem:[%s231 + $0xd8] sm:$0xff]
        %v307 = vld [vmem:[%s231 + $0xe0] sm:$0xff]
        %v308 = vld [vmem:[%s231 + $0xe8] sm:$0xff]
        %v309 = vld [vmem:[%s231 + $0xf0] sm:$0xff]
        %v310 = vld [vmem:[%s231 + $0xf8] sm:$0xff]
        %v311 = vld [vmem:[%s240] sm:$0xff]
        %v312 = vld [vmem:[%s240 + $0x8] sm:$0xff]
        %v313 = vld [vmem:[%s240 + $0x10] sm:$0xff]
        %v314 = vld [vmem:[%s240 + $0x18] sm:$0xff]
        %v315 = vld [vmem:[%s240 + $0x20] sm:$0xff]
        %v316 = vld [vmem:[%s240 + $0x28] sm:$0xff]
        %v317 = vld [vmem:[%s240 + $0x30] sm:$0xff]
        %v318 = vld [vmem:[%s240 + $0x38] sm:$0xff]
        %v319 = vld [vmem:[%s240 + $0x40] sm:$0xff]
        %v320 = vld [vmem:[%s240 + $0x48] sm:$0xff]
        %v321 = vld [vmem:[%s240 + $0x50] sm:$0xff]
        %v322 = vld [vmem:[%s240 + $0x58] sm:$0xff]
        %v323 = vld [vmem:[%s240 + $0x60] sm:$0xff]
        %v324 = vld [vmem:[%s240 + $0x68] sm:$0xff]
        %v325 = vld [vmem:[%s240 + $0x70] sm:$0xff]
        %v326 = vld [vmem:[%s240 + $0x78] sm:$0xff]
        %v327 = vld [vmem:[%s240 + $0x80] sm:$0xff]
        %v328 = vld [vmem:[%s240 + $0x88] sm:$0xff]
        %v329 = vld [vmem:[%s240 + $0x90] sm:$0xff]
        %v330 = vld [vmem:[%s240 + $0x98] sm:$0xff]
        %v331 = vld [vmem:[%s240 + $0xa0] sm:$0xff]
        %v332 = vld [vmem:[%s240 + $0xa8] sm:$0xff]
        %v333 = vld [vmem:[%s240 + $0xb0] sm:$0xff]
        %v334 = vld [vmem:[%s240 + $0xb8] sm:$0xff]
        %v335 = vld [vmem:[%s240 + $0xc0] sm:$0xff]
        %v336 = vld [vmem:[%s240 + $0xc8] sm:$0xff]
        %v337 = vld [vmem:[%s240 + $0xd0] sm:$0xff]
        %v338 = vld [vmem:[%s240 + $0xd8] sm:$0xff]
        %v339 = vld [vmem:[%s240 + $0xe0] sm:$0xff]
        %v340 = vld [vmem:[%s240 + $0xe8] sm:$0xff]
        %v341 = vld [vmem:[%s240 + $0xf0] sm:$0xff]
        %v342 = vld [vmem:[%s240 + $0xf8] sm:$0xff]
        %343 = vmatprep.subr.mxu0 %v312
        %344 = vmatpush1.xpose.msra.mxu0 %v311
        %345 = vmatprep.subr.mxu0 %v314
        %346 = vmatpush1.xpose.msra.mxu0 %v313
        %347 = vmatprep.subr.mxu0 %v316
        %348 = vmatpush1.xpose.msra.mxu0 %v315
        %349 = vmatprep.subr.mxu0 %v318
        %350 = vmatpush1.xpose.msra.mxu0 %v317
        %351 = vmatprep.subr.mxu0 %v320
        %352 = vmatpush1.xpose.msra.mxu0 %v319
        %353 = vmatprep.subr.mxu0 %v322
        %354 = vmatpush1.xpose.msra.mxu0 %v321
        %355 = vmatprep.subr.mxu0 %v324
        %356 = vmatpush1.xpose.msra.mxu0 %v323
        %357 = vmatprep.subr.mxu0 %v326
        %358 = vmatpush1.xpose.msra.mxu0 %v325
        %359 = vmatprep.subr.mxu0 %v328
        %360 = vmatpush1.xpose.msra.mxu0 %v327
        %361 = vmatprep.subr.mxu0 %v330
        %362 = vmatpush1.xpose.msra.mxu0 %v329
        %363 = vmatprep.subr.mxu0 %v332
        %364 = vmatpush1.xpose.msra.mxu0 %v331
        %365 = vmatprep.subr.mxu0 %v334
        %366 = vmatpush1.xpose.msra.mxu0 %v333
        %367 = vmatprep.subr.mxu0 %v336
        %368 = vmatpush1.xpose.msra.mxu0 %v335
        %369 = vmatprep.subr.mxu0 %v338
        %370 = vmatpush1.xpose.msra.mxu0 %v337
        %371 = vmatprep.subr.mxu0 %v340
        %372 = vmatpush1.xpose.msra.mxu0 %v339
        %373 = vmatprep.subr.mxu0 %v342
        %374 = vmatpush1.xpose.msra.mxu0 %v341
        %375 = vmatprep.subr.mxu0 0.0
        %376 = vmatpush1.xpose.msra.mxu0 0.0
        %377 = vmatprep.subr.mxu0 0.0
        %378 = vmatpush1.xpose.msra.mxu0 0.0
        %379 = vmatprep.subr.mxu0 0.0
        %380 = vmatpush1.xpose.msra.mxu0 0.0
        %381 = vmatprep.subr.mxu0 0.0
        %382 = vmatpush1.xpose.msra.mxu0 0.0
        %383 = vmatprep.subr.mxu0 0.0
        %384 = vmatpush1.xpose.msra.mxu0 0.0
        %385 = vmatprep.subr.mxu0 0.0
        %386 = vmatpush1.xpose.msra.mxu0 0.0
        %387 = vmatprep.subr.mxu0 0.0
        %388 = vmatpush1.xpose.msra.mxu0 0.0
        %389 = vmatprep.subr.mxu0 0.0
        %390 = vmatpush1.xpose.msra.mxu0 0.0
        %391 = vmatprep.subr.mxu0 0.0
        %392 = vmatpush1.xpose.msra.mxu0 0.0
        %393 = vmatprep.subr.mxu0 0.0
        %394 = vmatpush1.xpose.msra.mxu0 0.0
        %395 = vmatprep.subr.mxu0 0.0
        %396 = vmatpush1.xpose.msra.mxu0 0.0
        %397 = vmatprep.subr.mxu0 0.0
        %398 = vmatpush1.xpose.msra.mxu0 0.0
        %399 = vmatprep.subr.mxu0 0.0
        %400 = vmatpush1.xpose.msra.mxu0 0.0
        %401 = vmatprep.subr.mxu0 0.0
        %402 = vmatpush1.xpose.msra.mxu0 0.0
        %403 = vmatprep.subr.mxu0 0.0
        %404 = vmatpush1.xpose.msra.mxu0 0.0
        %405 = vmatprep.subr.mxu0 0.0
        %406 = vmatpush1.xpose.msra.mxu0 0.0
        %407 = vmatprep.mubr.f32.mxu0 %v280
        %408 = vmatmul.mubr.f32.gmra.mrb[0].mxu0 %v279
        %v409 = vpop.f32.mrb[0].mxu0
        %v410 = vadd.f32 0.0, %v409
        %v411 = vpop.f32.mrb[0].mxu0
        %412 = vmatprep.mubr.f32.mxu0 %v282
        %413 = vmatmul.mubr.f32.gmra.mrb[0].mxu0 %v281
        %v414 = vpop.f32.mrb[0].mxu0
        %v415 = vadd.f32 0.0, %v414
        %v416 = vpop.f32.mrb[0].mxu0
        %417 = vmatprep.mubr.f32.mxu0 %v284
        %418 = vmatmul.mubr.f32.gmra.mrb[0].mxu0 %v283
        %v419 = vpop.f32.mrb[0].mxu0
        %v420 = vadd.f32 0.0, %v419
        %v421 = vpop.f32.mrb[0].mxu0
        %422 = vmatprep.mubr.f32.mxu0 %v286
        %423 = vmatmul.mubr.f32.gmra.mrb[0].mxu0 %v285
        %v424 = vpop.f32.mrb[0].mxu0
        %v425 = vadd.f32 0.0, %v424
        %v426 = vpop.f32.mrb[0].mxu0
        %427 = vmatprep.mubr.f32.mxu0 %v288
        %428 = vmatmul.mubr.f32.gmra.mrb[0].mxu0 %v287
        %v429 = vpop.f32.mrb[0].mxu0
        %v430 = vadd.f32 0.0, %v429
        %v431 = vpop.f32.mrb[0].mxu0
        %432 = vmatprep.mubr.f32.mxu0 %v290
        %433 = vmatmul.mubr.f32.gmra.mrb[0].mxu0 %v289
        %v434 = vpop.f32.mrb[0].mxu0
        %v435 = vadd.f32 0.0, %v434
        %v436 = vpop.f32.mrb[0].mxu0
        %437 = vmatprep.mubr.f32.mxu0 %v292
        %438 = vmatmul.mubr.f32.gmra.mrb[0].mxu0 %v291
        %v439 = vpop.f32.mrb[0].mxu0
        %v440 = vadd.f32 0.0, %v439
        %v441 = vpop.f32.mrb[0].mxu0
        %442 = vmatprep.mubr.f32.mxu0 %v294
        %443 = vmatmul.mubr.f32.gmra.mrb[0].mxu0 %v293
        %v444 = vpop.f32.mrb[0].mxu0
        %v445 = vadd.f32 0.0, %v444
        %v446 = vpop.f32.mrb[0].mxu0
        %447 = vmatprep.mubr.f32.mxu0 %v296
        %448 = vmatmul.mubr.f32.gmra.mrb[0].mxu0 %v295
        %v449 = vpop.f32.mrb[0].mxu0
        %v450 = vadd.f32 0.0, %v449
        %v451 = vpop.f32.mrb[0].mxu0
        %452 = vmatprep.mubr.f32.mxu0 %v298
        %453 = vmatmul.mubr.f32.gmra.mrb[0].mxu0 %v297
        %v454 = vpop.f32.mrb[0].mxu0
        %v455 = vadd.f32 0.0, %v454
        %v456 = vpop.f32.mrb[0].mxu0
        %457 = vmatprep.mubr.f32.mxu0 %v300
        %458 = vmatmul.mubr.f32.gmra.mrb[0].mxu0 %v299
        %v459 = vpop.f32.mrb[0].mxu0
        %v460 = vadd.f32 0.0, %v459
        %v461 = vpop.f32.mrb[0].mxu0
        %462 = vmatprep.mubr.f32.mxu0 %v302
        %463 = vmatmul.mubr.f32.gmra.mrb[0].mxu0 %v301
        %v464 = vpop.f32.mrb[0].mxu0
        %v465 = vadd.f32 0.0, %v464
        %v466 = vpop.f32.mrb[0].mxu0
        %467 = vmatprep.mubr.f32.mxu0 %v304
        %468 = vmatmul.mubr.f32.gmra.mrb[0].mxu0 %v303
        %v469 = vpop.f32.mrb[0].mxu0
        %v470 = vadd.f32 0.0, %v469
        %v471 = vpop.f32.mrb[0].mxu0
        %472 = vmatprep.mubr.f32.mxu0 %v306
        %473 = vmatmul.mubr.f32.gmra.mrb[0].mxu0 %v305
        %v474 = vpop.f32.mrb[0].mxu0
        %v475 = vadd.f32 0.0, %v474
        %v476 = vpop.f32.mrb[0].mxu0
        %477 = vmatprep.mubr.f32.mxu0 %v308
        %478 = vmatmul.mubr.f32.gmra.mrb[0].mxu0 %v307
        %v479 = vpop.f32.mrb[0].mxu0
        %v480 = vadd.f32 0.0, %v479
        %v481 = vpop.f32.mrb[0].mxu0
        %482 = vmatprep.mubr.f32.mxu0 %v310
        %483 = vmatmul.mubr.f32.gmra.mrb[0].mxu0 %v309
        %v484 = vpop.f32.mrb[0].mxu0
        %v485 = vadd.f32 0.0, %v484
        %v486 = vpop.f32.mrb[0].mxu0
        %487 = vdwg.mxu0
        %p488 = scmp.eq.s32.totalorder %s30, 0
        // Predicated region
        $region41: #{tpu_custom_call.1} parent=31 // pred_check
          %p489 = pneg %p488
        $region42: #{tpu_custom_call.1} parent=31 // pred_check_branch
          %491 = sbr.rel (%p489) target = $region44
        $region43: #{tpu_custom_call.1} parent=31 // pred_region
          %v492 = vld [vmem:[%s277] sm:$0x1]
          %v494 = vlaneseq
          %v495 = vshrl.u32 %v494, 7
          %v496 = vsub.s32 0, %v495
          %v497 = vrot.slane %v492, %v496
          %v499 = vadd.f32 %v410, %v497
          %v500 = vadd.f32 %v415, %v497
          %v501 = vadd.f32 %v420, %v497
          %v502 = vadd.f32 %v425, %v497
          %v503 = vadd.f32 %v430, %v497
          %v504 = vadd.f32 %v435, %v497
          %v505 = vadd.f32 %v440, %v497
          %v506 = vadd.f32 %v445, %v497
          %v507 = vadd.f32 %v450, %v497
          %v508 = vadd.f32 %v455, %v497
          %v509 = vadd.f32 %v460, %v497
          %v510 = vadd.f32 %v465, %v497
          %v511 = vadd.f32 %v470, %v497
          %v512 = vadd.f32 %v475, %v497
          %v513 = vadd.f32 %v480, %v497
          %v514 = vadd.f32 %v485, %v497
          %515 = vst [vmem:[#allocation2] sm:$0xff] %v499
          %516 = vst [vmem:[#allocation2 + $0x8] sm:$0xff] %v500
          %517 = vst [vmem:[#allocation2 + $0x10] sm:$0xff] %v501
          %518 = vst [vmem:[#allocation2 + $0x18] sm:$0xff] %v502
          %519 = vst [vmem:[#allocation2 + $0x20] sm:$0xff] %v503
          %520 = vst [vmem:[#allocation2 + $0x28] sm:$0xff] %v504
          %521 = vst [vmem:[#allocation2 + $0x30] sm:$0xff] %v505
          %522 = vst [vmem:[#allocation2 + $0x38] sm:$0xff] %v506
          %523 = vst [vmem:[#allocation2 + $0x40] sm:$0xff] %v507
          %524 = vst [vmem:[#allocation2 + $0x48] sm:$0xff] %v508
          %525 = vst [vmem:[#allocation2 + $0x50] sm:$0xff] %v509
          %526 = vst [vmem:[#allocation2 + $0x58] sm:$0xff] %v510
          %527 = vst [vmem:[#allocation2 + $0x60] sm:$0xff] %v511
          %528 = vst [vmem:[#allocation2 + $0x68] sm:$0xff] %v512
          %529 = vst [vmem:[#allocation2 + $0x70] sm:$0xff] %v513
          %530 = vst [vmem:[#allocation2 + $0x78] sm:$0xff] %v514
        $region44: #{tpu_custom_call.1} parent=31 // pred_fallthru
          _
        %p531 = scmp.gt.s32.totalorder %s30, 0
        // Predicated region
        $region45: #{tpu_custom_call.1} parent=31 // pred_check
          %p532 = pneg %p531
        $region46: #{tpu_custom_call.1} parent=31 // pred_check_branch
          %534 = sbr.rel (%p532) target = $region48
        $region47: #{tpu_custom_call.1} parent=31 // pred_region
          %v535 = vld [vmem:[#allocation2] sm:$0xff]
          %v536 = vld [vmem:[#allocation2 + $0x8] sm:$0xff]
          %v537 = vld [vmem:[#allocation2 + $0x10] sm:$0xff]
          %v538 = vld [vmem:[#allocation2 + $0x18] sm:$0xff]
          %v539 = vld [vmem:[#allocation2 + $0x20] sm:$0xff]
          %v540 = vld [vmem:[#allocation2 + $0x28] sm:$0xff]
          %v541 = vld [vmem:[#allocation2 + $0x30] sm:$0xff]
          %v542 = vld [vmem:[#allocation2 + $0x38] sm:$0xff]
          %v543 = vld [vmem:[#allocation2 + $0x40] sm:$0xff]
          %v544 = vld [vmem:[#allocation2 + $0x48] sm:$0xff]
          %v545 = vld [vmem:[#allocation2 + $0x50] sm:$0xff]
          %v546 = vld [vmem:[#allocation2 + $0x58] sm:$0xff]
          %v547 = vld [vmem:[#allocation2 + $0x60] sm:$0xff]
          %v548 = vld [vmem:[#allocation2 + $0x68] sm:$0xff]
          %v549 = vld [vmem:[#allocation2 + $0x70] sm:$0xff]
          %v550 = vld [vmem:[#allocation2 + $0x78] sm:$0xff]
          %v551 = vadd.f32 %v535, %v410
          %v552 = vadd.f32 %v536, %v415
          %v553 = vadd.f32 %v537, %v420
          %v554 = vadd.f32 %v538, %v425
          %v555 = vadd.f32 %v539, %v430
          %v556 = vadd.f32 %v540, %v435
          %v557 = vadd.f32 %v541, %v440
          %v558 = vadd.f32 %v542, %v445
          %v559 = vadd.f32 %v543, %v450
          %v560 = vadd.f32 %v544, %v455
          %v561 = vadd.f32 %v545, %v460
          %v562 = vadd.f32 %v546, %v465
          %v563 = vadd.f32 %v547, %v470
          %v564 = vadd.f32 %v548, %v475
          %v565 = vadd.f32 %v549, %v480
          %v566 = vadd.f32 %v550, %v485
          %567 = vst [vmem:[#allocation2] sm:$0xff] %v551
          %568 = vst [vmem:[#allocation2 + $0x8] sm:$0xff] %v552
          %569 = vst [vmem:[#allocation2 + $0x10] sm:$0xff] %v553
          %570 = vst [vmem:[#allocation2 + $0x18] sm:$0xff] %v554
          %571 = vst [vmem:[#allocation2 + $0x20] sm:$0xff] %v555
          %572 = vst [vmem:[#allocation2 + $0x28] sm:$0xff] %v556
          %573 = vst [vmem:[#allocation2 + $0x30] sm:$0xff] %v557
          %574 = vst [vmem:[#allocation2 + $0x38] sm:$0xff] %v558
          %575 = vst [vmem:[#allocation2 + $0x40] sm:$0xff] %v559
          %576 = vst [vmem:[#allocation2 + $0x48] sm:$0xff] %v560
          %577 = vst [vmem:[#allocation2 + $0x50] sm:$0xff] %v561
          %578 = vst [vmem:[#allocation2 + $0x58] sm:$0xff] %v562
          %579 = vst [vmem:[#allocation2 + $0x60] sm:$0xff] %v563
          %580 = vst [vmem:[#allocation2 + $0x68] sm:$0xff] %v564
          %581 = vst [vmem:[#allocation2 + $0x70] sm:$0xff] %v565
          %582 = vst [vmem:[#allocation2 + $0x78] sm:$0xff] %v566
        $region48: #{tpu_custom_call.1} parent=31 // pred_fallthru
          _
        %p583 = scmp.eq.s32.totalorder %s30, 1
        // Predicated region
        $region49: #{tpu_custom_call.1} parent=31 // pred_check
          %p584 = pneg %p583
        $region50: #{tpu_custom_call.1} parent=31 // pred_check_branch
          %586 = sbr.rel (%p584) target = $region52
        $region51: #{tpu_custom_call.1} parent=31 // pred_region
          %v587 = vld [vmem:[#allocation2] sm:$0xff]
          %v588 = vld [vmem:[#allocation2 + $0x8] sm:$0xff]
          %v589 = vld [vmem:[#allocation2 + $0x10] sm:$0xff]
          %v590 = vld [vmem:[#allocation2 + $0x18] sm:$0xff]
          %v591 = vld [vmem:[#allocation2 + $0x20] sm:$0xff]
          %v592 = vld [vmem:[#allocation2 + $0x28] sm:$0xff]
          %v593 = vld [vmem:[#allocation2 + $0x30] sm:$0xff]
          %v594 = vld [vmem:[#allocation2 + $0x38] sm:$0xff]
          %v595 = vld [vmem:[#allocation2 + $0x40] sm:$0xff]
          %v596 = vld [vmem:[#allocation2 + $0x48] sm:$0xff]
          %v597 = vld [vmem:[#allocation2 + $0x50] sm:$0xff]
          %v598 = vld [vmem:[#allocation2 + $0x58] sm:$0xff]
          %v599 = vld [vmem:[#allocation2 + $0x60] sm:$0xff]
          %v600 = vld [vmem:[#allocation2 + $0x68] sm:$0xff]
          %v601 = vld [vmem:[#allocation2 + $0x70] sm:$0xff]
          %v602 = vld [vmem:[#allocation2 + $0x78] sm:$0xff]
          %603 = vst [vmem:[%s270] sm:$0xff] %v587
          %604 = vst [vmem:[%s270 + $0x8] sm:$0xff] %v588
          %605 = vst [vmem:[%s270 + $0x10] sm:$0xff] %v589
          %606 = vst [vmem:[%s270 + $0x18] sm:$0xff] %v590
          %607 = vst [vmem:[%s270 + $0x20] sm:$0xff] %v591
          %608 = vst [vmem:[%s270 + $0x28] sm:$0xff] %v592
          %609 = vst [vmem:[%s270 + $0x30] sm:$0xff] %v593
          %610 = vst [vmem:[%s270 + $0x38] sm:$0xff] %v594
          %611 = vst [vmem:[%s270 + $0x40] sm:$0xff] %v595
          %612 = vst [vmem:[%s270 + $0x48] sm:$0xff] %v596
          %613 = vst [vmem:[%s270 + $0x50] sm:$0xff] %v597
          %614 = vst [vmem:[%s270 + $0x58] sm:$0xff] %v598
          %615 = vst [vmem:[%s270 + $0x60] sm:$0xff] %v599
          %616 = vst [vmem:[%s270 + $0x68] sm:$0xff] %v600
          %617 = vst [vmem:[%s270 + $0x70] sm:$0xff] %v601
          %618 = vst [vmem:[%s270 + $0x78] sm:$0xff] %v602
        $region52: #{tpu_custom_call.1} parent=31 // pred_fallthru
          _
        %s619 = sand.u32 %s134, 1
        %s620 = scalar_lea.sflag [#allocation5], %s619
        %s621 = sand.u32 %s134, 1
        %s622 = smul.addr %s621, 128
        %s623 = scalar_lea.vmem [#allocation8], %s622
        // Predicated region
        $region53: #{tpu_custom_call.1} parent=31 // pred_check
          %p624 = pneg %p144
        $region54: #{tpu_custom_call.1} parent=31 // pred_check_branch
          %626 = sbr.rel (%p624) target = $region56
        $region55: #{tpu_custom_call.1} parent=31 // pred_region
          %s627 = smul.u32 16, %s28
          %s629 = ssub.s32 2048, 2048
          %630 = vsyncadd %s620, %s629
          %s631 = sadd.s32 %s29, %s627
          %s632 = smul.addr %s631, 128
          %s633 = scalar_lea.hbm %s3, %s632
          %s634 = sshll.u32 %s623, 4
          %s635 = int_to_ptr.vmem [resolvable:$true] %s634
          %640 = dma.vmem_to_hbm [thread:$0]  %s635, 2048, %s633, %s620, 128, 128, 8
        $region56: #{tpu_custom_call.1} parent=31 // pred_fallthru
          _
      $region32: #{tpu_custom_call.1} parent=5 // pred_fallthru
        _
      %p641 = scmp.le.s32.totalorder 2, %s18
      // Predicated region
      $region57: #{tpu_custom_call.1} parent=5 // pred_check
        %p642 = pneg %p641
      $region58: #{tpu_custom_call.1} parent=5 // pred_check_branch
        %644 = sbr.rel (%p642) target = $region60
      $region59: #{tpu_custom_call.1} parent=5 // pred_region
        %s645 = ssub.s32 %s18, 2
        // Predicated region
        $region61: #{tpu_custom_call.1} parent=59 // pred_check
          %p646 = pneg %p150
        $region62: #{tpu_custom_call.1} parent=59 // pred_check_branch
          %648 = sbr.rel (%p646) target = $region64
        $region63: #{tpu_custom_call.1} parent=59 // pred_region
          %s649 = sand.u32 %s135, 1
          %s650 = scalar_lea.sflag [#allocation5], %s649
          %s651 = sand.u32 %s135, 1
          %s652 = smul.addr %s651, 128
          %s653 = scalar_lea.vmem [#allocation8], %s652
          %654 = dma.done %s650, 2048
        $region64: #{tpu_custom_call.1} parent=59 // pred_fallthru
          _
      $region60: #{tpu_custom_call.1} parent=5 // pred_fallthru
        _
    $region6: #{tpu_custom_call.1} parent=1 // loop_footer
      %s22 = sadd.s32 1, %s18
    $region7: #{tpu_custom_call.1} parent=1 // loop_footer_branch
      %17 = sbr.rel target = $region3
    $region8: #{tpu_custom_call.1} parent=1 // loop_exit
      _
    %655 = vsyncpa [#allocation4], 1
    %s656 = scalar_lea.sflag [#allocation4], 1
    %657 = vsyncpa %s656, 1
    %658 = vsyncpa [#allocation7], 1
    %s659 = scalar_lea.sflag [#allocation7], 1
    %660 = vsyncpa %s659, 1
    %661 = vsyncpa [#allocation5], 1
    %s662 = scalar_lea.sflag [#allocation5], 1
    %663 = vsyncpa %s662, 1

</llo_original>
